<compile_context>
chip_gen: v5e
topology: v5e:2x2
jax: 0.10.0
libtpu: 0.0.40
codegen_flags: <defaults>
</compile_context>

<pallas_src>
import math

import jax
import jax.numpy as jnp
from jax.experimental import pallas as pl
from jax.experimental.pallas import tpu as pltpu


_EPS = 1e-4
_MAX_BLOCK_BYTES = 8 * 1024 * 1024      # per-array column-slab budget (f32)
_VMEM_LIMIT_BYTES = 64 * 1024 * 1024    # raised scoped VMEM limit


def _pick_group_block(G, d, N):
    """Number of groups per grid step (column slab width = Gb * d)."""
    itemsize = 4
    if N * G * d * itemsize <= _MAX_BLOCK_BYTES:
        return G                          # whole (N, D) slab fits comfortably
    # Otherwise tile columns: Gb must divide G and give a 128-aligned slab.
    for gb in range(G - 1, 0, -1):
        if G % gb:
            continue
        if (gb * d) % 128:
            continue
        if N * gb * d * itemsize <= _MAX_BLOCK_BYTES:
            return gb
    return G                              # fallback: full width
    # TODO(synk): for very large N*d (v7x, 64 MiB VMEM) add N-tiling with a
    # (d, d) covariance accumulator instead of whole-N column slabs.


def _make_stats_kernel(gb, d):
    def kernel(x_ref, cov_ref):
        # x_ref: (N, gb*d) column slab, f32.  cov_ref: (gb, d, d).
        x = x_ref[...]
        n = x.shape[0]
        mean = jnp.mean(x, axis=0, keepdims=True)          # (1, gb*d)
        xc = x - mean
        for g in range(gb):                                # static unroll
            xg = xc[:, g * d:(g + 1) * d]                  # (N, d) static slice
            # cov = xc_g^T @ xc_g / N without an explicit transpose.
            cov = jax.lax.dot_general(
                xg, xg, (((0,), (0,)), ((), ())),
                preferred_element_type=jnp.float32) / n
            cov_ref[g] = cov.astype(cov_ref.dtype)
    return kernel


def _make_whiten_kernel(gb, d):
    def kernel(x_ref, u_ref, s_ref, out_ref):
        # x_ref/out_ref: (N, gb*d); u_ref: (gb, d, d); s_ref: (gb, 1, d).
        x = x_ref[...]
        mean = jnp.mean(x, axis=0, keepdims=True)          # recompute (cheap,
        xc = x - mean                                      # avoids xc HBM trip)
        for g in range(gb):                                # static unroll
            U = u_ref[g]                                   # (d, d)
            # ridge folded into eigenvalues; rsqrt runs on the EUP.
            rs = jax.lax.rsqrt(jnp.maximum(s_ref[g], 0.0) + _EPS)   # (1, d)
            # W = U diag(S^-1/2) U^T, no explicit U.T (contract last axes).
            W = jax.lax.dot_general(
                U * rs, U, (((1,), (1,)), ((), ())),
                preferred_element_type=jnp.float32)        # (d, d)
            xg = xc[:, g * d:(g + 1) * d]                  # (N, d)
            out_ref[:, g * d:(g + 1) * d] = jnp.dot(
                xg, W, preferred_element_type=jnp.float32).astype(out_ref.dtype)
    return kernel


def shuffled_group_whitening(x, num_groups=None, shuffle=True, key=None):
    """Forward pass of ShuffledGroupWhitening (engine='symeig')."""
    x = x.astype(jnp.float32)
    N, D = x.shape
    G = num_groups if num_groups is not None else int(math.ceil(2 * D / N))
    assert D % G == 0
    d = D // G
    do_shuffle = shuffle and (G != 1)

    if do_shuffle:
        # TODO(synk): column shuffle/un-shuffle kept as XLA gathers; folding
        # them into the kernels would need a scalar-prefetched index table.
        new_idx = jax.random.permutation(key, D)
        x = x[:, new_idx]

    gb = _pick_group_block(G, d, N)
    cb = gb * d                       # column-slab width (lane axis)
    n_blocks = G // gb

    compiler_params = pltpu.CompilerParams(
        dimension_semantics=("parallel",),
        vmem_limit_bytes=_VMEM_LIMIT_BYTES)

    # Pass 1: per-group covariances straight from the (N, D) layout.
    covs = pl.pallas_call(
        _make_stats_kernel(gb, d),
        out_shape=jax.ShapeDtypeStruct((G, d, d), jnp.float32),
        grid=(n_blocks,),
        in_specs=[pl.BlockSpec((N, cb), lambda c: (0, c))],
        out_specs=pl.BlockSpec((gb, d, d), lambda c: (c, 0, 0)),
        compiler_params=compiler_params,
    )(x)

    # TODO(synk): eigendecomposition (torch.symeig) has no Pallas TPU
    # equivalent; computed with jnp.linalg.eigh in plain JAX.
    S, U = jnp.linalg.eigh(covs)                  # S: (G, d), U: (G, d, d)
    S = S.reshape(G, 1, d)

    # Pass 2: recenter, build W = U diag((S+eps)^-1/2) U^T, whiten.
    out = pl.pallas_call(
        _make_whiten_kernel(gb, d),
        out_shape=jax.ShapeDtypeStruct((N, D), jnp.float32),
        grid=(n_blocks,),
        in_specs=[pl.BlockSpec((N, cb), lambda c: (0, c)),
                  pl.BlockSpec((gb, d, d), lambda c: (c, 0, 0)),
                  pl.BlockSpec((gb, 1, d), lambda c: (c, 0, 0))],
        out_specs=pl.BlockSpec((N, cb), lambda c: (0, c)),
        compiler_params=compiler_params,
    )(x, U, S)

    if do_shuffle:
        out = out[:, jnp.argsort(new_idx)]        # undo the shuffle
    return out


if __name__ == "__main__":
    key = jax.random.PRNGKey(0)
    k_x, k_perm = jax.random.split(key)

    N, D = 8, 32          # small shapes consistent with the (N, D) forward
    num_groups = 4        # D % num_groups == 0

    x = jax.random.normal(k_x, (N, D), dtype=jnp.float32)
    out = shuffled_group_whitening(x, num_groups=num_groups,
                                   shuffle=True, key=k_perm)
    out = jax.block_until_ready(out)
    assert out.shape == (N, D)
    assert jnp.all(jnp.isfinite(out))
    print("KERNEL_OK")
</pallas_src>

<mosaic_0001>
module attributes {stable_mosaic.version = 11 : i64} {
  func.func @kernel(%arg0: i32, %arg1: memref<8x32xf32, #tpu.memory_space<vmem>>, %arg2: memref<4x8x8xf32, #tpu.memory_space<vmem>>) attributes {dimension_semantics = [#tpu.dimension_semantics<parallel>], iteration_bounds = array<i64: 1>, scalar_prefetch = 0 : i64, scratch_operands = 0 : i64, tpu.core_type = #tpu.core_type<tc>, window_params = [{transform_indices = @transform_0, window_bounds = array<i64: 8, 32>}, {transform_indices = @transform_1, window_bounds = array<i64: 4, 8, 8>}]} {
    %c0 = arith.constant 0 : index
    %c0_0 = arith.constant 0 : index
    %0 = vector.load %arg1[%c0, %c0_0] : memref<8x32xf32, #tpu.memory_space<vmem>>, vector<8x32xf32>
    %cst = arith.constant dense<0.000000e+00> : vector<32xf32>
    %1 = vector.multi_reduction <add>, %0, %cst [0] : vector<8x32xf32> to vector<32xf32>
    %2 = vector.shape_cast %1 : vector<32xf32> to vector<1x32xf32>
    %cst_1 = arith.constant 8.000000e+00 : f32
    %3 = vector.broadcast %cst_1 : f32 to vector<1x32xf32>
    %4 = arith.divf %2, %3 : vector<1x32xf32>
    %5 = vector.broadcast %4 : vector<1x32xf32> to vector<8x32xf32>
    %6 = arith.subf %0, %5 : vector<8x32xf32>
    %7 = vector.extract_strided_slice %6 {offsets = [0, 0], sizes = [8, 8], strides = [1, 1]} : vector<8x32xf32> to vector<8x8xf32>
    %cst_2 = arith.constant dense<0.000000e+00> : vector<8x8xf32>
    %8 = tpu.matmul %7, %7, %cst_2 {dimension_numbers = #tpu.dot_dimension_numbers<[0], [0], [1], [1], [0, 1, 1, 1], [], []>} : vector<8x8xf32>, vector<8x8xf32>, vector<8x8xf32> -> vector<8x8xf32>
    %cst_3 = arith.constant 8.000000e+00 : f32
    %9 = vector.broadcast %cst_3 : f32 to vector<8x8xf32>
    %10 = arith.divf %8, %9 : vector<8x8xf32>
    %c0_4 = arith.constant 0 : index
    %c0_5 = arith.constant 0 : index
    %c0_6 = arith.constant 0 : index
    %11 = vector.load %arg2[%c0_4, %c0_5, %c0_6] : memref<4x8x8xf32, #tpu.memory_space<vmem>>, vector<1x8x8xf32>
    %12 = vector.shape_cast %11 : vector<1x8x8xf32> to vector<8x8xf32>
    %13 = vector.shape_cast %10 : vector<8x8xf32> to vector<1x8x8xf32>
    tpu.vector_store %arg2[%c0_4, %c0_5, %c0_6], %13 {strides = array<i32>} : memref<4x8x8xf32, #tpu.memory_space<vmem>>, vector<1x8x8xf32>,
    %14 = vector.extract_strided_slice %6 {offsets = [0, 8], sizes = [8, 8], strides = [1, 1]} : vector<8x32xf32> to vector<8x8xf32>
    %cst_7 = arith.constant dense<0.000000e+00> : vector<8x8xf32>
    %15 = tpu.matmul %14, %14, %cst_7 {dimension_numbers = #tpu.dot_dimension_numbers<[0], [0], [1], [1], [0, 1, 1, 1], [], []>} : vector<8x8xf32>, vector<8x8xf32>, vector<8x8xf32> -> vector<8x8xf32>
    %cst_8 = arith.constant 8.000000e+00 : f32
    %16 = vector.broadcast %cst_8 : f32 to vector<8x8xf32>
    %17 = arith.divf %15, %16 : vector<8x8xf32>
    %c1 = arith.constant 1 : index
    %c0_9 = arith.constant 0 : index
    %c0_10 = arith.constant 0 : index
    %18 = vector.load %arg2[%c1, %c0_9, %c0_10] : memref<4x8x8xf32, #tpu.memory_space<vmem>>, vector<1x8x8xf32>
    %19 = vector.shape_cast %18 : vector<1x8x8xf32> to vector<8x8xf32>
    %20 = vector.shape_cast %17 : vector<8x8xf32> to vector<1x8x8xf32>
    tpu.vector_store %arg2[%c1, %c0_9, %c0_10], %20 {strides = array<i32>} : memref<4x8x8xf32, #tpu.memory_space<vmem>>, vector<1x8x8xf32>,
    %21 = vector.extract_strided_slice %6 {offsets = [0, 16], sizes = [8, 8], strides = [1, 1]} : vector<8x32xf32> to vector<8x8xf32>
    %cst_11 = arith.constant dense<0.000000e+00> : vector<8x8xf32>
    %22 = tpu.matmul %21, %21, %cst_11 {dimension_numbers = #tpu.dot_dimension_numbers<[0], [0], [1], [1], [0, 1, 1, 1], [], []>} : vector<8x8xf32>, vector<8x8xf32>, vector<8x8xf32> -> vector<8x8xf32>
    %cst_12 = arith.constant 8.000000e+00 : f32
    %23 = vector.broadcast %cst_12 : f32 to vector<8x8xf32>
    %24 = arith.divf %22, %23 : vector<8x8xf32>
    %c2 = arith.constant 2 : index
    %c0_13 = arith.constant 0 : index
    %c0_14 = arith.constant 0 : index
    %25 = vector.load %arg2[%c2, %c0_13, %c0_14] : memref<4x8x8xf32, #tpu.memory_space<vmem>>, vector<1x8x8xf32>
    %26 = vector.shape_cast %25 : vector<1x8x8xf32> to vector<8x8xf32>
    %27 = vector.shape_cast %24 : vector<8x8xf32> to vector<1x8x8xf32>
    tpu.vector_store %arg2[%c2, %c0_13, %c0_14], %27 {strides = array<i32>} : memref<4x8x8xf32, #tpu.memory_space<vmem>>, vector<1x8x8xf32>,
    %28 = vector.extract_strided_slice %6 {offsets = [0, 24], sizes = [8, 8], strides = [1, 1]} : vector<8x32xf32> to vector<8x8xf32>
    %cst_15 = arith.constant dense<0.000000e+00> : vector<8x8xf32>
    %29 = tpu.matmul %28, %28, %cst_15 {dimension_numbers = #tpu.dot_dimension_numbers<[0], [0], [1], [1], [0, 1, 1, 1], [], []>} : vector<8x8xf32>, vector<8x8xf32>, vector<8x8xf32> -> vector<8x8xf32>
    %cst_16 = arith.constant 8.000000e+00 : f32
    %30 = vector.broadcast %cst_16 : f32 to vector<8x8xf32>
    %31 = arith.divf %29, %30 : vector<8x8xf32>
    %c3 = arith.constant 3 : index
    %c0_17 = arith.constant 0 : index
    %c0_18 = arith.constant 0 : index
    %32 = vector.load %arg2[%c3, %c0_17, %c0_18] : memref<4x8x8xf32, #tpu.memory_space<vmem>>, vector<1x8x8xf32>
    %33 = vector.shape_cast %32 : vector<1x8x8xf32> to vector<8x8xf32>
    %34 = vector.shape_cast %31 : vector<8x8xf32> to vector<1x8x8xf32>
    tpu.vector_store %arg2[%c3, %c0_17, %c0_18], %34 {strides = array<i32>} : memref<4x8x8xf32, #tpu.memory_space<vmem>>, vector<1x8x8xf32>,
    return
  }
  func.func @transform_0(%arg0: i32) -> (i32, i32) {
    %c0_i32 = arith.constant 0 : i32
    %c0_i32_0 = arith.constant 0 : i32
    return %c0_i32, %arg0 : i32, i32
  }
  func.func @transform_1(%arg0: i32) -> (i32, i32, i32) {
    %c0_i32 = arith.constant 0 : i32
    %c0_i32_0 = arith.constant 0 : i32
    %c0_i32_1 = arith.constant 0 : i32
    return %arg0, %c0_i32, %c0_i32_0 : i32, i32, i32
  }
}

</mosaic_0001>

<llo_original>
// kernel: tpu_custom_call.1
$region0: #{tpu_custom_call.1}
  #allocation0 [shape = 'u32[]', space=smem, size = 0x4, offset = 0x4, fixed_abs, tag = 'smem constant byte address 0x4 - core index']
  #allocation1 [shape = 'u32[72,128]{1,0:T(1,128)}', space=vmem, size = 0x9000, scoped, tag = 'internal scratch']
  %s0 = inlined_call_operand.hbm [shape: f32[8,32], index: 0, kind: input, shape index: {}]
  %s1 = inlined_call_operand.hbm [shape: f32[4,8,8], index: 1, kind: output, shape index: {}]
  %s2 = sld [smem:[#allocation0]]
  $region18: #{tpu_custom_call.1} parent=0
    _
  %s4 = ssub.s32 1, %s2
  %s5 = scalar_select 0, %s4, %s2
  $region1: #{tpu_custom_call.1} parent=0
    #allocation2 [shape = 'u8[4096]{0}', space=vmem, size = 0x1000, scoped, tag = 'input window, operand 0, single buffered']
    #allocation3 [shape = 's32[1]{0}', space=sflag, size = 0x4, scoped, tag = 'scoped memory for tpu_custom_call.1']
    #allocation4 [shape = 's32[1]{0}', space=sflag, size = 0x4, scoped, tag = 'scoped memory for tpu_custom_call.1']
    #allocation5 [shape = 'u8[16384]{0}', space=vmem, size = 0x4000, scoped, tag = 'output window, operand 0, single buffered']
    %6 = vsyncpa [#allocation3], 0
    %7 = vsyncpa [#allocation4], 0
    // Predicated region
    $region2: #{tpu_custom_call.1} parent=1 // pred_check
      _
    $region3: #{tpu_custom_call.1} parent=1 // pred_check_branch
      %9 = sbr.rel (0) target = $region5
    $region4: #{tpu_custom_call.1} parent=1 // pred_region
      %11 = vsyncadd [#allocation3], 0
      %s13 = sshll.u32 %s0, 4
      %s14 = int_to_ptr.hbm [resolvable:$true] %s13
      %s15 = sshll.u32 [#allocation2], 4
      %s16 = int_to_ptr.vmem [resolvable:$true] %s15
      %18 = dma.hbm_to_vmem [thread:$0]  %s14, 128, %s16, [#allocation3]
    $region5: #{tpu_custom_call.1} parent=1 // pred_fallthru
      _
    // Predicated region
    $region6: #{tpu_custom_call.1} parent=1 // pred_check
      _
    $region7: #{tpu_custom_call.1} parent=1 // pred_check_branch
      %20 = sbr.rel (0) target = $region9
    $region8: #{tpu_custom_call.1} parent=1 // pred_region
      %22 = dma.done [#allocation3], 128
    $region9: #{tpu_custom_call.1} parent=1 // pred_fallthru
      _
    %v23 = vld [vmem:[#allocation2] sm:$0xff]
    %vm24 = vcmask 261120
    %v25 = vsel %vm24, %v23, 0.0
    %v26 = vrot.slane %v25, 4
    %v27 = vadd.f32 %v25, %v26
    %v28 = vrot.slane %v27, 2
    %v29 = vadd.f32 %v27, %v28
    %v30 = vrot.slane %v29, 1
    %v31 = vadd.f32 %v29, %v30
    %v32 = vrcp.pop 8.0
    %v33 = vmul.f32 8.0, %v32
    %v34 = vsub.f32 1.0, %v33
    %v35 = vmul.f32 %v32, %v34
    %v36 = vadd.f32 %v32, %v35
    %vm37 = vweird.f32 %v32
    %v38 = vsel %vm37, %v32, %v36
    %v39 = vmul.f32 %v31, %v38
    %v40 = vsub.f32 %v23, %v39
    %41 = vxpose.xlu0.b32.start [1/16] %v40, 128
    %42 = vxpose.xlu0.b32.cont [2/16] 0.0, 128
    %43 = vxpose.xlu0.b32.cont [3/16] 0.0, 128
    %44 = vxpose.xlu0.b32.cont [4/16] 0.0, 128
    %45 = vxpose.xlu0.b32.cont [5/16] 0.0, 128
    %46 = vxpose.xlu0.b32.cont [6/16] 0.0, 128
    %47 = vxpose.xlu0.b32.cont [7/16] 0.0, 128
    %48 = vxpose.xlu0.b32.cont [8/16] 0.0, 128
    %49 = vxpose.xlu0.b32.cont [9/16] 0.0, 128
    %50 = vxpose.xlu0.b32.cont [10/16] 0.0, 128
    %51 = vxpose.xlu0.b32.cont [11/16] 0.0, 128
    %52 = vxpose.xlu0.b32.cont [12/16] 0.0, 128
    %53 = vxpose.xlu0.b32.cont [13/16] 0.0, 128
    %54 = vxpose.xlu0.b32.cont [14/16] 0.0, 128
    %55 = vxpose.xlu0.b32.cont [15/16] 0.0, 128
    %56 = vxpose.xlu0.b32.end [16/16] 0.0, 128
    %v57 = vpop.trf.xlu0
    %v58 = vpop.trf.xlu0
    %v59 = vpop.trf.xlu0
    %v60 = vpop.trf.xlu0
    %v61 = vpop.trf.xlu0
    %v62 = vpop.trf.xlu0
    %v63 = vpop.trf.xlu0
    %v64 = vpop.trf.xlu0
    %v65 = vpop.trf.xlu0
    %v66 = vpop.trf.xlu0
    %v67 = vpop.trf.xlu0
    %v68 = vpop.trf.xlu0
    %v69 = vpop.trf.xlu0
    %v70 = vpop.trf.xlu0
    %v71 = vpop.trf.xlu0
    %v72 = vpop.trf.xlu0
    %vm73 = vcmask 64512
    %v75 = vsel %vm73, %v57, 0
    %77 = vmatpush.msra.mxu0 0.0
    %78 = vmatpush.msra.mxu0 0.0
    %79 = vmatpush.msra.mxu0 0.0
    %80 = vmatpush.msra.mxu0 0.0
    %81 = vmatpush.msra.mxu0 0.0
    %82 = vmatpush.msra.mxu0 0.0
    %83 = vmatpush.msra.mxu0 0.0
    %84 = vmatpush.msra.mxu0 0.0
    %85 = vmatpush.msra.mxu0 0.0
    %86 = vmatpush.msra.mxu0 0.0
    %87 = vmatpush.msra.mxu0 0.0
    %88 = vmatpush.msra.mxu0 0.0
    %89 = vmatpush.msra.mxu0 0.0
    %90 = vmatpush.msra.mxu0 0.0
    %91 = vmatpush.msra.mxu0 0.0
    %92 = vmatpush.msra.mxu0 %v40
    %93 = vmatmul.f32.gmra.mxu0 %v75
    %v94 = vpop.f32.mrf.mxu0
    %v95 = vadd.f32 0.0, %v94
    %96 = vdwg.mxu0
    %v97 = vmul.f32 %v95, %v38
    %98 = vst.msk [vmem:[#allocation5] sm:$0xff] %vm73, %v97
    %100 = vrot.lane.b32.xlu0 %v40, 120
    %v101 = vpop.permute.xlu0 %100
    %103 = vxpose.xlu0.b32.start [1/16] %v101, 128
    %104 = vxpose.xlu0.b32.cont [2/16] 0.0, 128
    %105 = vxpose.xlu0.b32.cont [3/16] 0.0, 128
    %106 = vxpose.xlu0.b32.cont [4/16] 0.0, 128
    %107 = vxpose.xlu0.b32.cont [5/16] 0.0, 128
    %108 = vxpose.xlu0.b32.cont [6/16] 0.0, 128
    %109 = vxpose.xlu0.b32.cont [7/16] 0.0, 128
    %110 = vxpose.xlu0.b32.cont [8/16] 0.0, 128
    %111 = vxpose.xlu0.b32.cont [9/16] 0.0, 128
    %112 = vxpose.xlu0.b32.cont [10/16] 0.0, 128
    %113 = vxpose.xlu0.b32.cont [11/16] 0.0, 128
    %114 = vxpose.xlu0.b32.cont [12/16] 0.0, 128
    %115 = vxpose.xlu0.b32.cont [13/16] 0.0, 128
    %116 = vxpose.xlu0.b32.cont [14/16] 0.0, 128
    %117 = vxpose.xlu0.b32.cont [15/16] 0.0, 128
    %118 = vxpose.xlu0.b32.end [16/16] 0.0, 128
    %v119 = vpop.trf.xlu0
    %v120 = vpop.trf.xlu0
    %v121 = vpop.trf.xlu0
    %v122 = vpop.trf.xlu0
    %v123 = vpop.trf.xlu0
    %v124 = vpop.trf.xlu0
    %v125 = vpop.trf.xlu0
    %v126 = vpop.trf.xlu0
    %v127 = vpop.trf.xlu0
    %v128 = vpop.trf.xlu0
    %v129 = vpop.trf.xlu0
    %v130 = vpop.trf.xlu0
    %v131 = vpop.trf.xlu0
    %v132 = vpop.trf.xlu0
    %v133 = vpop.trf.xlu0
    %v134 = vpop.trf.xlu0
    %v136 = vsel %vm73, %v119, 0
    %138 = vmatpush.msra.mxu0 0.0
    %139 = vmatpush.msra.mxu0 0.0
    %140 = vmatpush.msra.mxu0 0.0
    %141 = vmatpush.msra.mxu0 0.0
    %142 = vmatpush.msra.mxu0 0.0
    %143 = vmatpush.msra.mxu0 0.0
    %144 = vmatpush.msra.mxu0 0.0
    %145 = vmatpush.msra.mxu0 0.0
    %146 = vmatpush.msra.mxu0 0.0
    %147 = vmatpush.msra.mxu0 0.0
    %148 = vmatpush.msra.mxu0 0.0
    %149 = vmatpush.msra.mxu0 0.0
    %150 = vmatpush.msra.mxu0 0.0
    %151 = vmatpush.msra.mxu0 0.0
    %152 = vmatpush.msra.mxu0 0.0
    %153 = vmatpush.msra.mxu0 %v101
    %154 = vmatmul.f32.gmra.mxu0 %v136
    %v155 = vpop.f32.mrf.mxu0
    %v156 = vadd.f32 0.0, %v155
    %157 = vdwg.mxu0
    %v158 = vmul.f32 %v156, %v38
    %s159 = scalar_lea.vmem [#allocation5], 8
    %160 = vst.msk [vmem:[%s159] sm:$0xff] %vm73, %v158
    %161 = vrot.lane.b32.xlu0 %v40, 112
    %v162 = vpop.permute.xlu0 %161
    %164 = vxpose.xlu0.b32.start [1/16] %v162, 128
    %165 = vxpose.xlu0.b32.cont [2/16] 0.0, 128
    %166 = vxpose.xlu0.b32.cont [3/16] 0.0, 128
    %167 = vxpose.xlu0.b32.cont [4/16] 0.0, 128
    %168 = vxpose.xlu0.b32.cont [5/16] 0.0, 128
    %169 = vxpose.xlu0.b32.cont [6/16] 0.0, 128
    %170 = vxpose.xlu0.b32.cont [7/16] 0.0, 128
    %171 = vxpose.xlu0.b32.cont [8/16] 0.0, 128
    %172 = vxpose.xlu0.b32.cont [9/16] 0.0, 128
    %173 = vxpose.xlu0.b32.cont [10/16] 0.0, 128
    %174 = vxpose.xlu0.b32.cont [11/16] 0.0, 128
    %175 = vxpose.xlu0.b32.cont [12/16] 0.0, 128
    %176 = vxpose.xlu0.b32.cont [13/16] 0.0, 128
    %177 = vxpose.xlu0.b32.cont [14/16] 0.0, 128
    %178 = vxpose.xlu0.b32.cont [15/16] 0.0, 128
    %179 = vxpose.xlu0.b32.end [16/16] 0.0, 128
    %v180 = vpop.trf.xlu0
    %v181 = vpop.trf.xlu0
    %v182 = vpop.trf.xlu0
    %v183 = vpop.trf.xlu0
    %v184 = vpop.trf.xlu0
    %v185 = vpop.trf.xlu0
    %v186 = vpop.trf.xlu0
    %v187 = vpop.trf.xlu0
    %v188 = vpop.trf.xlu0
    %v189 = vpop.trf.xlu0
    %v190 = vpop.trf.xlu0
    %v191 = vpop.trf.xlu0
    %v192 = vpop.trf.xlu0
    %v193 = vpop.trf.xlu0
    %v194 = vpop.trf.xlu0
    %v195 = vpop.trf.xlu0
    %v197 = vsel %vm73, %v180, 0
    %199 = vmatpush.msra.mxu0 0.0
    %200 = vmatpush.msra.mxu0 0.0
    %201 = vmatpush.msra.mxu0 0.0
    %202 = vmatpush.msra.mxu0 0.0
    %203 = vmatpush.msra.mxu0 0.0
    %204 = vmatpush.msra.mxu0 0.0
    %205 = vmatpush.msra.mxu0 0.0
    %206 = vmatpush.msra.mxu0 0.0
    %207 = vmatpush.msra.mxu0 0.0
    %208 = vmatpush.msra.mxu0 0.0
    %209 = vmatpush.msra.mxu0 0.0
    %210 = vmatpush.msra.mxu0 0.0
    %211 = vmatpush.msra.mxu0 0.0
    %212 = vmatpush.msra.mxu0 0.0
    %213 = vmatpush.msra.mxu0 0.0
    %214 = vmatpush.msra.mxu0 %v162
    %215 = vmatmul.f32.gmra.mxu0 %v197
    %v216 = vpop.f32.mrf.mxu0
    %v217 = vadd.f32 0.0, %v216
    %218 = vdwg.mxu0
    %v219 = vmul.f32 %v217, %v38
    %s220 = scalar_lea.vmem [#allocation5], 16
    %221 = vst.msk [vmem:[%s220] sm:$0xff] %vm73, %v219
    %222 = vrot.lane.b32.xlu0 %v40, 104
    %v223 = vpop.permute.xlu0 %222
    %225 = vxpose.xlu0.b32.start [1/16] %v223, 128
    %226 = vxpose.xlu0.b32.cont [2/16] 0.0, 128
    %227 = vxpose.xlu0.b32.cont [3/16] 0.0, 128
    %228 = vxpose.xlu0.b32.cont [4/16] 0.0, 128
    %229 = vxpose.xlu0.b32.cont [5/16] 0.0, 128
    %230 = vxpose.xlu0.b32.cont [6/16] 0.0, 128
    %231 = vxpose.xlu0.b32.cont [7/16] 0.0, 128
    %232 = vxpose.xlu0.b32.cont [8/16] 0.0, 128
    %233 = vxpose.xlu0.b32.cont [9/16] 0.0, 128
    %234 = vxpose.xlu0.b32.cont [10/16] 0.0, 128
    %235 = vxpose.xlu0.b32.cont [11/16] 0.0, 128
    %236 = vxpose.xlu0.b32.cont [12/16] 0.0, 128
    %237 = vxpose.xlu0.b32.cont [13/16] 0.0, 128
    %238 = vxpose.xlu0.b32.cont [14/16] 0.0, 128
    %239 = vxpose.xlu0.b32.cont [15/16] 0.0, 128
    %240 = vxpose.xlu0.b32.end [16/16] 0.0, 128
    %v241 = vpop.trf.xlu0
    %v242 = vpop.trf.xlu0
    %v243 = vpop.trf.xlu0
    %v244 = vpop.trf.xlu0
    %v245 = vpop.trf.xlu0
    %v246 = vpop.trf.xlu0
    %v247 = vpop.trf.xlu0
    %v248 = vpop.trf.xlu0
    %v249 = vpop.trf.xlu0
    %v250 = vpop.trf.xlu0
    %v251 = vpop.trf.xlu0
    %v252 = vpop.trf.xlu0
    %v253 = vpop.trf.xlu0
    %v254 = vpop.trf.xlu0
    %v255 = vpop.trf.xlu0
    %v256 = vpop.trf.xlu0
    %v258 = vsel %vm73, %v241, 0
    %260 = vmatpush.msra.mxu0 0.0
    %261 = vmatpush.msra.mxu0 0.0
    %262 = vmatpush.msra.mxu0 0.0
    %263 = vmatpush.msra.mxu0 0.0
    %264 = vmatpush.msra.mxu0 0.0
    %265 = vmatpush.msra.mxu0 0.0
    %266 = vmatpush.msra.mxu0 0.0
    %267 = vmatpush.msra.mxu0 0.0
    %268 = vmatpush.msra.mxu0 0.0
    %269 = vmatpush.msra.mxu0 0.0
    %270 = vmatpush.msra.mxu0 0.0
    %271 = vmatpush.msra.mxu0 0.0
    %272 = vmatpush.msra.mxu0 0.0
    %273 = vmatpush.msra.mxu0 0.0
    %274 = vmatpush.msra.mxu0 0.0
    %275 = vmatpush.msra.mxu0 %v223
    %276 = vmatmul.f32.gmra.mxu0 %v258
    %v277 = vpop.f32.mrf.mxu0
    %v278 = vadd.f32 0.0, %v277
    %279 = vdwg.mxu0
    %v280 = vmul.f32 %v278, %v38
    %s281 = scalar_lea.vmem [#allocation5], 24
    %282 = vst.msk [vmem:[%s281] sm:$0xff] %vm73, %v280
    // Predicated region
    $region10: #{tpu_custom_call.1} parent=1 // pred_check
      _
    $region11: #{tpu_custom_call.1} parent=1 // pred_check_branch
      %284 = sbr.rel (0) target = $region13
    $region12: #{tpu_custom_call.1} parent=1 // pred_region
      %286 = vsyncadd [#allocation4], 0
      %s287 = sshll.u32 [#allocation5], 4
      %s288 = int_to_ptr.vmem [resolvable:$true] %s287
      %s289 = sshll.u32 %s1, 4
      %s290 = int_to_ptr.hbm [resolvable:$true] %s289
      %295 = dma.vmem_to_hbm [thread:$0]  %s288, 512, %s290, [#allocation4], 128, 128, 8
    $region13: #{tpu_custom_call.1} parent=1 // pred_fallthru
      _
    // Predicated region
    $region14: #{tpu_custom_call.1} parent=1 // pred_check
      _
    $region15: #{tpu_custom_call.1} parent=1 // pred_check_branch
      %297 = sbr.rel (0) target = $region17
    $region16: #{tpu_custom_call.1} parent=1 // pred_region
      %299 = dma.done [#allocation4], 512
    $region17: #{tpu_custom_call.1} parent=1 // pred_fallthru
      _
    %300 = vsyncpa [#allocation3], 1
    %301 = vsyncpa [#allocation4], 1

</llo_original>
